<compile_context>
chip_gen: v5e
topology: v5e:2x2
jax: 0.10.0
libtpu: 0.0.40
codegen_flags: <defaults>
</compile_context>

<pallas_src>
import jax
import jax.numpy as jnp
from jax.experimental import pallas as pl
from jax.experimental.pallas import tpu as pltpu

HIDDEN = 64
TILE_B_MAX = 2048  # max batch columns per grid step (multiple of 128)


def _round_up(x, m):
    return ((x + m - 1) // m) * m


def _choose_tile_b(B):
    """Batch tile (lane dim) size.

    Small B: one block (block dim == full array dim, so no 128 constraint).
    Large B: >= 2 tiles, 128-aligned, capped at TILE_B_MAX — lets v7x shard
    the 'parallel' grid axis across its two TensorCores while costing only a
    ~0.35 us extra grid step on single-TC v5e/v6e.
    """
    if B < 256:
        return B
    half = _round_up(pl.cdiv(B, 2), 128)
    return min(TILE_B_MAX, half)


def critic_kernel(xT_ref, w1t_ref, b1_ref, w2t_ref, b2_ref, w3t_ref, b3_ref,
                  o_ref):
    """One batch tile (batch in lanes) of the critic forward pass.

    xT_ref : (S+A, tile_b)   transposed, concatenated [state; action]
    w*t    : transposed weights, so every layer is h = W^T @ x^T with
             N = tile_b (lane-dense activations and full MXU columns).
    """
    # Layer 1: (H, S+A) @ (S+A, tile_b) -> (H, tile_b), bias + ReLU on VPU.
    h1 = jnp.dot(w1t_ref[...], xT_ref[...], preferred_element_type=jnp.float32)
    h1 = jnp.maximum(h1 + b1_ref[...], 0.0)

    # Layer 2: (H, H) @ (H, tile_b) -> (H, tile_b).
    h2 = jnp.dot(w2t_ref[...], h1, preferred_element_type=jnp.float32)
    h2 = jnp.maximum(h2 + b2_ref[...], 0.0)

    # Layer 3: (1, H) @ (H, tile_b) -> (1, tile_b); lane-dense result.
    q = jnp.dot(w3t_ref[...], h2, preferred_element_type=jnp.float32)
    o_ref[...] = (q + b3_ref[...]).astype(o_ref.dtype)


def critic_forward(state, action, params):
    """state: (B, S) f32, action: (B, A) f32 -> (B, 1) f32."""
    w1, b1, w2, b2, w3, b3 = params
    B, S = state.shape
    A = action.shape[1]
    H = w1.shape[1]
    K = S + A

    # Single concatenated + transposed input: batch lives in the lane dim.
    xT = jnp.concatenate([state, action], axis=1).T   # (K, B)
    w1t = w1.T                                        # (H, K)
    w2t = w2.T                                        # (H, H)
    w3t = w3.reshape(1, H)                            # (1, H)
    b1c = b1.reshape(H, 1)                            # broadcast over lanes
    b2c = b2.reshape(H, 1)
    b3s = b3.reshape(1, 1)

    tile_b = _choose_tile_b(B)
    grid = (pl.cdiv(B, tile_b),)

    def const_spec(shp):
        # Constant block index -> loaded once, VMEM-resident across steps.
        return pl.BlockSpec(shp, lambda i: (0, 0))

    qT = pl.pallas_call(
        critic_kernel,
        out_shape=jax.ShapeDtypeStruct((1, B), jnp.float32),
        grid=grid,
        in_specs=[
            pl.BlockSpec((K, tile_b), lambda i: (0, i)),  # x^T (streamed)
            const_spec((H, K)),   # w1^T
            const_spec((H, 1)),   # b1
            const_spec((H, H)),   # w2^T
            const_spec((H, 1)),   # b2
            const_spec((1, H)),   # w3^T
            const_spec((1, 1)),   # b3
        ],
        out_specs=pl.BlockSpec((1, tile_b), lambda i: (0, i)),  # lane-dense q^T
        compiler_params=pltpu.CompilerParams(
            dimension_semantics=("parallel",)),
    )(xT, w1t, b1c, w2t, b2c, w3t, b3s)

    return qT.T  # (B, 1)


def init_params(key, state_dim, action_dim, hidden=HIDDEN):
    """Deterministic init mimicking nn.Linear's U(-1/sqrt(fan_in), 1/sqrt(fan_in))."""
    def linear(key, fan_in, fan_out):
        kw, kb = jax.random.split(key)
        bound = 1.0 / jnp.sqrt(fan_in)
        w = jax.random.uniform(kw, (fan_in, fan_out), jnp.float32, -bound, bound)
        b = jax.random.uniform(kb, (1, fan_out), jnp.float32, -bound, bound)
        return w, b

    k1, k2, k3 = jax.random.split(key, 3)
    w1, b1 = linear(k1, state_dim + action_dim, hidden)
    w2, b2 = linear(k2, hidden, hidden)
    w3, b3 = linear(k3, hidden, 1)
    return (w1, b1, w2, b2, w3, b3)


def critic_ref(state, action, params):
    """Pure-JAX reference for correctness checking."""
    w1, b1, w2, b2, w3, b3 = params
    x = jnp.concatenate([state, action], axis=1)
    h1 = jnp.maximum(x @ w1 + b1, 0.0)
    h2 = jnp.maximum(h1 @ w2 + b2, 0.0)
    return h2 @ w3 + b3


if __name__ == "__main__":
    # Small shapes: batch=8, state_dim=17, action_dim=6 (MuJoCo-style task).
    B, STATE_DIM, ACTION_DIM = 8, 17, 6

    key = jax.random.PRNGKey(0)
    k_s, k_a, k_p = jax.random.split(key, 3)

    state = jax.random.normal(k_s, (B, STATE_DIM), jnp.float32)
    action = jax.random.normal(k_a, (B, ACTION_DIM), jnp.float32)
    params = init_params(k_p, STATE_DIM, ACTION_DIM)

    q = jax.block_until_ready(critic_forward(state, action, params))
    q_ref = critic_ref(state, action, params)
    assert q.shape == (B, 1), q.shape
    assert jnp.allclose(q, q_ref, atol=1e-4, rtol=1e-4), \
        "mismatch vs JAX reference (B=8)"

    # Exercise the batched, multi-block grid path (2 x 1024-column tiles).
    B_BIG = 2048
    kb_s, kb_a = jax.random.split(jax.random.PRNGKey(1))
    state_big = jax.random.normal(kb_s, (B_BIG, STATE_DIM), jnp.float32)
    action_big = jax.random.normal(kb_a, (B_BIG, ACTION_DIM), jnp.float32)
    q_big = jax.block_until_ready(critic_forward(state_big, action_big, params))
    q_big_ref = critic_ref(state_big, action_big, params)
    assert q_big.shape == (B_BIG, 1), q_big.shape
    assert jnp.allclose(q_big, q_big_ref, atol=1e-4, rtol=1e-4), \
        "mismatch vs JAX reference (B=2048)"

    print("KERNEL_OK")
</pallas_src>

<mosaic_0001>
module attributes {stable_mosaic.version = 11 : i64} {
  func.func @critic_kernel(%arg0: i32, %arg1: memref<23x8xf32, #tpu.memory_space<vmem>>, %arg2: memref<64x23xf32, #tpu.memory_space<vmem>>, %arg3: memref<64x1xf32, #tpu.memory_space<vmem>>, %arg4: memref<64x64xf32, #tpu.memory_space<vmem>>, %arg5: memref<64x1xf32, #tpu.memory_space<vmem>>, %arg6: memref<1x64xf32, #tpu.memory_space<vmem>>, %arg7: memref<1x1xf32, #tpu.memory_space<vmem>>, %arg8: memref<1x8xf32, #tpu.memory_space<vmem>>) attributes {dimension_semantics = [#tpu.dimension_semantics<parallel>], iteration_bounds = array<i64: 1>, scalar_prefetch = 0 : i64, scratch_operands = 0 : i64, tpu.core_type = #tpu.core_type<tc>, window_params = [{transform_indices = @transform_0, window_bounds = array<i64: 23, 8>}, {pipeline_mode = #tpu.pipeline_mode<synchronous>, transform_indices = @transform_1, window_bounds = array<i64: 64, 23>}, {pipeline_mode = #tpu.pipeline_mode<synchronous>, transform_indices = @transform_2, window_bounds = array<i64: 64, 1>}, {pipeline_mode = #tpu.pipeline_mode<synchronous>, transform_indices = @transform_3, window_bounds = array<i64: 64, 64>}, {pipeline_mode = #tpu.pipeline_mode<synchronous>, transform_indices = @transform_4, window_bounds = array<i64: 64, 1>}, {pipeline_mode = #tpu.pipeline_mode<synchronous>, transform_indices = @transform_5, window_bounds = array<i64: 1, 64>}, {pipeline_mode = #tpu.pipeline_mode<synchronous>, transform_indices = @transform_6, window_bounds = array<i64: 1, 1>}, {transform_indices = @transform_7, window_bounds = array<i64: 1, 8>}]} {
    %c0 = arith.constant 0 : index
    %c0_0 = arith.constant 0 : index
    %0 = vector.load %arg2[%c0, %c0_0] : memref<64x23xf32, #tpu.memory_space<vmem>>, vector<64x23xf32>
    %c0_1 = arith.constant 0 : index
    %c0_2 = arith.constant 0 : index
    %1 = vector.load %arg1[%c0_1, %c0_2] : memref<23x8xf32, #tpu.memory_space<vmem>>, vector<23x8xf32>
    %cst = arith.constant dense<0.000000e+00> : vector<64x8xf32>
    %2 = tpu.matmul %0, %1, %cst {dimension_numbers = #tpu.dot_dimension_numbers<[1], [0], [0], [1], [0, 0, 1, 1], [], []>} : vector<64x23xf32>, vector<23x8xf32>, vector<64x8xf32> -> vector<64x8xf32>
    %c0_3 = arith.constant 0 : index
    %c0_4 = arith.constant 0 : index
    %3 = vector.load %arg3[%c0_3, %c0_4] : memref<64x1xf32, #tpu.memory_space<vmem>>, vector<64x1xf32>
    %4 = vector.broadcast %3 : vector<64x1xf32> to vector<64x8xf32>
    %5 = arith.addf %2, %4 : vector<64x8xf32>
    %cst_5 = arith.constant 0.000000e+00 : f32
    %6 = vector.broadcast %cst_5 : f32 to vector<64x8xf32>
    %7 = arith.maximumf %5, %6 : vector<64x8xf32>
    %c0_6 = arith.constant 0 : index
    %c0_7 = arith.constant 0 : index
    %8 = vector.load %arg4[%c0_6, %c0_7] : memref<64x64xf32, #tpu.memory_space<vmem>>, vector<64x64xf32>
    %cst_8 = arith.constant dense<0.000000e+00> : vector<64x8xf32>
    %9 = tpu.matmul %8, %7, %cst_8 {dimension_numbers = #tpu.dot_dimension_numbers<[1], [0], [0], [1], [0, 0, 1, 1], [], []>} : vector<64x64xf32>, vector<64x8xf32>, vector<64x8xf32> -> vector<64x8xf32>
    %c0_9 = arith.constant 0 : index
    %c0_10 = arith.constant 0 : index
    %10 = vector.load %arg5[%c0_9, %c0_10] : memref<64x1xf32, #tpu.memory_space<vmem>>, vector<64x1xf32>
    %11 = vector.broadcast %10 : vector<64x1xf32> to vector<64x8xf32>
    %12 = arith.addf %9, %11 : vector<64x8xf32>
    %cst_11 = arith.constant 0.000000e+00 : f32
    %13 = vector.broadcast %cst_11 : f32 to vector<64x8xf32>
    %14 = arith.maximumf %12, %13 : vector<64x8xf32>
    %c0_12 = arith.constant 0 : index
    %c0_13 = arith.constant 0 : index
    %15 = vector.load %arg6[%c0_12, %c0_13] : memref<1x64xf32, #tpu.memory_space<vmem>>, vector<1x64xf32>
    %cst_14 = arith.constant dense<0.000000e+00> : vector<1x8xf32>
    %16 = tpu.matmul %15, %14, %cst_14 {dimension_numbers = #tpu.dot_dimension_numbers<[1], [0], [0], [1], [0, 0, 1, 1], [], []>} : vector<1x64xf32>, vector<64x8xf32>, vector<1x8xf32> -> vector<1x8xf32>
    %c0_15 = arith.constant 0 : index
    %c0_16 = arith.constant 0 : index
    %17 = vector.load %arg7[%c0_15, %c0_16] : memref<1x1xf32, #tpu.memory_space<vmem>>, vector<1x1xf32>
    %18 = vector.broadcast %17 : vector<1x1xf32> to vector<1x8xf32>
    %19 = arith.addf %16, %18 : vector<1x8xf32>
    %c0_17 = arith.constant 0 : index
    %c0_18 = arith.constant 0 : index
    %20 = vector.load %arg8[%c0_17, %c0_18] : memref<1x8xf32, #tpu.memory_space<vmem>>, vector<1x8xf32>
    tpu.vector_store %arg8[%c0_17, %c0_18], %19 {strides = array<i32>} : memref<1x8xf32, #tpu.memory_space<vmem>>, vector<1x8xf32>,
    return
  }
  func.func @transform_0(%arg0: i32) -> (i32, i32) {
    %c0_i32 = arith.constant 0 : i32
    %c0_i32_0 = arith.constant 0 : i32
    return %c0_i32, %arg0 : i32, i32
  }
  func.func @transform_1(%arg0: i32) -> (i32, i32) {
    %c0_i32 = arith.constant 0 : i32
    %c0_i32_0 = arith.constant 0 : i32
    %c0_i32_1 = arith.constant 0 : i32
    return %c0_i32, %c0_i32_0 : i32, i32
  }
  func.func @transform_2(%arg0: i32) -> (i32, i32) {
    %c0_i32 = arith.constant 0 : i32
    %c0_i32_0 = arith.constant 0 : i32
    %c0_i32_1 = arith.constant 0 : i32
    return %c0_i32, %c0_i32_0 : i32, i32
  }
  func.func @transform_3(%arg0: i32) -> (i32, i32) {
    %c0_i32 = arith.constant 0 : i32
    %c0_i32_0 = arith.constant 0 : i32
    %c0_i32_1 = arith.constant 0 : i32
    return %c0_i32, %c0_i32_0 : i32, i32
  }
  func.func @transform_4(%arg0: i32) -> (i32, i32) {
    %c0_i32 = arith.constant 0 : i32
    %c0_i32_0 = arith.constant 0 : i32
    %c0_i32_1 = arith.constant 0 : i32
    return %c0_i32, %c0_i32_0 : i32, i32
  }
  func.func @transform_5(%arg0: i32) -> (i32, i32) {
    %c0_i32 = arith.constant 0 : i32
    %c0_i32_0 = arith.constant 0 : i32
    %c0_i32_1 = arith.constant 0 : i32
    return %c0_i32, %c0_i32_0 : i32, i32
  }
  func.func @transform_6(%arg0: i32) -> (i32, i32) {
    %c0_i32 = arith.constant 0 : i32
    %c0_i32_0 = arith.constant 0 : i32
    %c0_i32_1 = arith.constant 0 : i32
    return %c0_i32, %c0_i32_0 : i32, i32
  }
  func.func @transform_7(%arg0: i32) -> (i32, i32) {
    %c0_i32 = arith.constant 0 : i32
    %c0_i32_0 = arith.constant 0 : i32
    return %c0_i32, %arg0 : i32, i32
  }
}

</mosaic_0001>

<llo_original>
// kernel: tpu_custom_call.1
$region0: #{tpu_custom_call.1}
  #allocation0 [shape = 'u32[]', space=smem, size = 0x4, offset = 0x4, fixed_abs, tag = 'smem constant byte address 0x4 - core index']
  #allocation1 [shape = 'u32[72,128]{1,0:T(1,128)}', space=vmem, size = 0x9000, scoped, tag = 'internal scratch']
  #allocation2 [shape = 'f32[1,1]{1,0:T(1,128)S(1)}', space=vmem, size = 0x200, scoped, tag = 'scoped memory for tpu_custom_call.1']
  %s0 = inlined_call_operand.vmem [shape: f32[23,8], index: 0, kind: input, shape index: {}]
  %s1 = inlined_call_operand.vmem [shape: f32[64,23], index: 1, kind: input, shape index: {}]
  %s2 = inlined_call_operand.vmem [shape: f32[64,1], index: 2, kind: input, shape index: {}]
  %s3 = inlined_call_operand.vmem [shape: f32[64,64], index: 3, kind: input, shape index: {}]
  %s4 = inlined_call_operand.vmem [shape: f32[64,1], index: 4, kind: input, shape index: {}]
  %s5 = inlined_call_operand.vmem [shape: f32[1,64], index: 5, kind: input, shape index: {}]
  %s6 = inlined_call_operand.<no memory space> [shape: f32[1,1], index: 6, kind: input, shape index: {}]
  %s7 = inlined_call_operand.hbm [shape: f32[1,8], index: 7, kind: output, shape index: {}]
  %s8 = sld [smem:[#allocation0]]
  $region38: #{tpu_custom_call.1} parent=0
    _
  %s10 = ssub.s32 1, %s8
  %s11 = scalar_select 0, %s10, %s8
  %v12 = vstv %s6
  %13 = vst [vmem:[#allocation2] sm:$0x1] %v12
  $region1: #{tpu_custom_call.1} parent=0
    #allocation3 [shape = 'u8[512]{0}', space=vmem, size = 0x400, scoped, tag = 'output window, operand 0, single buffered']
    #allocation4 [shape = 's32[1]{0}', space=sflag, size = 0x4, scoped, tag = 'scoped memory for tpu_custom_call.1']
    %14 = vsyncpa [#allocation4], 0
    // Predicated region
    $region2: #{tpu_custom_call.1} parent=1 // pred_check
      _
    $region3: #{tpu_custom_call.1} parent=1 // pred_check_branch
      %16 = sbr.rel (0) target = $region5
    $region4: #{tpu_custom_call.1} parent=1 // pred_region
      _
    $region5: #{tpu_custom_call.1} parent=1 // pred_fallthru
      _
    // Predicated region
    $region6: #{tpu_custom_call.1} parent=1 // pred_check
      _
    $region7: #{tpu_custom_call.1} parent=1 // pred_check_branch
      %18 = sbr.rel (0) target = $region9
    $region8: #{tpu_custom_call.1} parent=1 // pred_region
      _
    $region9: #{tpu_custom_call.1} parent=1 // pred_fallthru
      _
    // Predicated region
    $region10: #{tpu_custom_call.1} parent=1 // pred_check
      _
    $region11: #{tpu_custom_call.1} parent=1 // pred_check_branch
      %20 = sbr.rel (0) target = $region13
    $region12: #{tpu_custom_call.1} parent=1 // pred_region
      _
    $region13: #{tpu_custom_call.1} parent=1 // pred_fallthru
      _
    // Predicated region
    $region14: #{tpu_custom_call.1} parent=1 // pred_check
      _
    $region15: #{tpu_custom_call.1} parent=1 // pred_check_branch
      %22 = sbr.rel (0) target = $region17
    $region16: #{tpu_custom_call.1} parent=1 // pred_region
      _
    $region17: #{tpu_custom_call.1} parent=1 // pred_fallthru
      _
    // Predicated region
    $region18: #{tpu_custom_call.1} parent=1 // pred_check
      _
    $region19: #{tpu_custom_call.1} parent=1 // pred_check_branch
      %24 = sbr.rel (0) target = $region21
    $region20: #{tpu_custom_call.1} parent=1 // pred_region
      _
    $region21: #{tpu_custom_call.1} parent=1 // pred_fallthru
      _
    // Predicated region
    $region22: #{tpu_custom_call.1} parent=1 // pred_check
      _
    $region23: #{tpu_custom_call.1} parent=1 // pred_check_branch
      %26 = sbr.rel (0) target = $region25
    $region24: #{tpu_custom_call.1} parent=1 // pred_region
      _
    $region25: #{tpu_custom_call.1} parent=1 // pred_fallthru
      _
    // Predicated region
    $region26: #{tpu_custom_call.1} parent=1 // pred_check
      _
    $region27: #{tpu_custom_call.1} parent=1 // pred_check_branch
      %28 = sbr.rel (0) target = $region29
    $region28: #{tpu_custom_call.1} parent=1 // pred_region
      _
    $region29: #{tpu_custom_call.1} parent=1 // pred_fallthru
      _
    %v29 = vld [vmem:[%s1] sm:$0xff]
    %v30 = vld [vmem:[%s1 + $0x8] sm:$0xff]
    %v31 = vld [vmem:[%s1 + $0x10] sm:$0xff]
    %v32 = vld [vmem:[%s1 + $0x18] sm:$0xff]
    %v33 = vld [vmem:[%s1 + $0x20] sm:$0xff]
    %v34 = vld [vmem:[%s1 + $0x28] sm:$0xff]
    %v35 = vld [vmem:[%s1 + $0x30] sm:$0xff]
    %v36 = vld [vmem:[%s1 + $0x38] sm:$0xff]
    %v37 = vld [vmem:[%s0] sm:$0xff]
    %v38 = vld [vmem:[%s0 + $0x8] sm:$0xff]
    %v39 = vld [vmem:[%s0 + $0x10] sm:$0x7f]
    %v40 = vld [vmem:[%s2] sm:$0xff]
    %v41 = vld [vmem:[%s2 + $0x8] sm:$0xff]
    %v42 = vld [vmem:[%s2 + $0x10] sm:$0xff]
    %v43 = vld [vmem:[%s2 + $0x18] sm:$0xff]
    %v44 = vld [vmem:[%s2 + $0x20] sm:$0xff]
    %v45 = vld [vmem:[%s2 + $0x28] sm:$0xff]
    %v46 = vld [vmem:[%s2 + $0x30] sm:$0xff]
    %v47 = vld [vmem:[%s2 + $0x38] sm:$0xff]
    %49 = vset.pattern.permute.xlu0 0
    %50 = vperm.xlu0 %49, %v40
    %v51 = vpop.permute.xlu0 %50
    %54 = vset.pattern.permute.xlu0 0
    %55 = vperm.xlu0 %54, %v41
    %v56 = vpop.permute.xlu0 %55
    %59 = vset.pattern.permute.xlu0 0
    %60 = vperm.xlu0 %59, %v42
    %v61 = vpop.permute.xlu0 %60
    %64 = vset.pattern.permute.xlu0 0
    %65 = vperm.xlu0 %64, %v43
    %v66 = vpop.permute.xlu0 %65
    %69 = vset.pattern.permute.xlu0 0
    %70 = vperm.xlu0 %69, %v44
    %v71 = vpop.permute.xlu0 %70
    %74 = vset.pattern.permute.xlu0 0
    %75 = vperm.xlu0 %74, %v45
    %v76 = vpop.permute.xlu0 %75
    %79 = vset.pattern.permute.xlu0 0
    %80 = vperm.xlu0 %79, %v46
    %v81 = vpop.permute.xlu0 %80
    %84 = vset.pattern.permute.xlu0 0
    %85 = vperm.xlu0 %84, %v47
    %v86 = vpop.permute.xlu0 %85
    %vm88 = vcmask 187392
    %v90 = vsel %vm88, %v29, 0
    %v93 = vsel %vm88, %v30, 0
    %v96 = vsel %vm88, %v31, 0
    %v99 = vsel %vm88, %v32, 0
    %v102 = vsel %vm88, %v33, 0
    %v105 = vsel %vm88, %v34, 0
    %v108 = vsel %vm88, %v35, 0
    %v111 = vsel %vm88, %v36, 0
    %vm113 = vcmask 1046528
    %v115 = vsel %vm113, %v39, 0
    %117 = vmatpush.msra.mxu0 0.0
    %118 = vmatpush.msra.mxu0 0.0
    %119 = vmatpush.msra.mxu0 0.0
    %120 = vmatpush.msra.mxu0 0.0
    %121 = vmatpush.msra.mxu0 0.0
    %122 = vmatpush.msra.mxu0 0.0
    %123 = vmatpush.msra.mxu0 0.0
    %124 = vmatpush.msra.mxu0 0.0
    %125 = vmatpush.msra.mxu0 0.0
    %126 = vmatpush.msra.mxu0 0.0
    %127 = vmatpush.msra.mxu0 0.0
    %128 = vmatpush.msra.mxu0 0.0
    %129 = vmatpush.msra.mxu0 0.0
    %130 = vmatpush.msra.mxu0 %v115
    %131 = vmatpush.msra.mxu0 %v38
    %132 = vmatpush.msra.mxu0 %v37
    %133 = vmatmul.f32.gmra.mxu0 %v90
    %v134 = vpop.f32.mrf.mxu0
    %v135 = vadd.f32 %v51, %v134
    %136 = vmatmul.f32.gmra.mxu0 %v93
    %v137 = vpop.f32.mrf.mxu0
    %v138 = vadd.f32 %v56, %v137
    %139 = vmatmul.f32.gmra.mxu0 %v96
    %v140 = vpop.f32.mrf.mxu0
    %v141 = vadd.f32 %v61, %v140
    %142 = vmatmul.f32.gmra.mxu0 %v99
    %v143 = vpop.f32.mrf.mxu0
    %v144 = vadd.f32 %v66, %v143
    %145 = vmatmul.f32.gmra.mxu0 %v102
    %v146 = vpop.f32.mrf.mxu0
    %v147 = vadd.f32 %v71, %v146
    %148 = vmatmul.f32.gmra.mxu0 %v105
    %v149 = vpop.f32.mrf.mxu0
    %v150 = vadd.f32 %v76, %v149
    %151 = vmatmul.f32.gmra.mxu0 %v108
    %v152 = vpop.f32.mrf.mxu0
    %v153 = vadd.f32 %v81, %v152
    %154 = vmatmul.f32.gmra.mxu0 %v111
    %v155 = vpop.f32.mrf.mxu0
    %v156 = vadd.f32 %v86, %v155
    %157 = vdwg.mxu0
    %v158 = vmax.f32 %v135, 0.0
    %v159 = vmax.f32 %v138, 0.0
    %v160 = vmax.f32 %v141, 0.0
    %v161 = vmax.f32 %v144, 0.0
    %v162 = vmax.f32 %v147, 0.0
    %v163 = vmax.f32 %v150, 0.0
    %v164 = vmax.f32 %v153, 0.0
    %v165 = vmax.f32 %v156, 0.0
    %v166 = vld [vmem:[%s3] sm:$0xff]
    %v167 = vld [vmem:[%s3 + $0x8] sm:$0xff]
    %v168 = vld [vmem:[%s3 + $0x10] sm:$0xff]
    %v169 = vld [vmem:[%s3 + $0x18] sm:$0xff]
    %v170 = vld [vmem:[%s3 + $0x20] sm:$0xff]
    %v171 = vld [vmem:[%s3 + $0x28] sm:$0xff]
    %v172 = vld [vmem:[%s3 + $0x30] sm:$0xff]
    %v173 = vld [vmem:[%s3 + $0x38] sm:$0xff]
    %v174 = vld [vmem:[%s4] sm:$0xff]
    %v175 = vld [vmem:[%s4 + $0x8] sm:$0xff]
    %v176 = vld [vmem:[%s4 + $0x10] sm:$0xff]
    %v177 = vld [vmem:[%s4 + $0x18] sm:$0xff]
    %v178 = vld [vmem:[%s4 + $0x20] sm:$0xff]
    %v179 = vld [vmem:[%s4 + $0x28] sm:$0xff]
    %v180 = vld [vmem:[%s4 + $0x30] sm:$0xff]
    %v181 = vld [vmem:[%s4 + $0x38] sm:$0xff]
    %183 = vset.pattern.permute.xlu0 0
    %184 = vperm.xlu0 %183, %v174
    %v185 = vpop.permute.xlu0 %184
    %188 = vset.pattern.permute.xlu0 0
    %189 = vperm.xlu0 %188, %v175
    %v190 = vpop.permute.xlu0 %189
    %193 = vset.pattern.permute.xlu0 0
    %194 = vperm.xlu0 %193, %v176
    %v195 = vpop.permute.xlu0 %194
    %198 = vset.pattern.permute.xlu0 0
    %199 = vperm.xlu0 %198, %v177
    %v200 = vpop.permute.xlu0 %199
    %203 = vset.pattern.permute.xlu0 0
    %204 = vperm.xlu0 %203, %v178
    %v205 = vpop.permute.xlu0 %204
    %208 = vset.pattern.permute.xlu0 0
    %209 = vperm.xlu0 %208, %v179
    %v210 = vpop.permute.xlu0 %209
    %213 = vset.pattern.permute.xlu0 0
    %214 = vperm.xlu0 %213, %v180
    %v215 = vpop.permute.xlu0 %214
    %218 = vset.pattern.permute.xlu0 0
    %219 = vperm.xlu0 %218, %v181
    %v220 = vpop.permute.xlu0 %219
    %vm222 = vcmask 523264
    %v224 = vsel %vm222, %v166, 0
    %v227 = vsel %vm222, %v167, 0
    %v230 = vsel %vm222, %v168, 0
    %v233 = vsel %vm222, %v169, 0
    %v236 = vsel %vm222, %v170, 0
    %v239 = vsel %vm222, %v171, 0
    %v242 = vsel %vm222, %v172, 0
    %v245 = vsel %vm222, %v173, 0
    %247 = vmatpush.msra.mxu0 0.0
    %248 = vmatpush.msra.mxu0 0.0
    %249 = vmatpush.msra.mxu0 0.0
    %250 = vmatpush.msra.mxu0 0.0
    %251 = vmatpush.msra.mxu0 0.0
    %252 = vmatpush.msra.mxu0 0.0
    %253 = vmatpush.msra.mxu0 0.0
    %254 = vmatpush.msra.mxu0 0.0
    %255 = vmatpush.msra.mxu0 %v165
    %256 = vmatpush.msra.mxu0 %v164
    %257 = vmatpush.msra.mxu0 %v163
    %258 = vmatpush.msra.mxu0 %v162
    %259 = vmatpush.msra.mxu0 %v161
    %260 = vmatpush.msra.mxu0 %v160
    %261 = vmatpush.msra.mxu0 %v159
    %262 = vmatpush.msra.mxu0 %v158
    %263 = vmatmul.f32.gmra.mxu0 %v224
    %v264 = vpop.f32.mrf.mxu0
    %v265 = vadd.f32 %v185, %v264
    %266 = vmatmul.f32.gmra.mxu0 %v227
    %v267 = vpop.f32.mrf.mxu0
    %v268 = vadd.f32 %v190, %v267
    %269 = vmatmul.f32.gmra.mxu0 %v230
    %v270 = vpop.f32.mrf.mxu0
    %v271 = vadd.f32 %v195, %v270
    %272 = vmatmul.f32.gmra.mxu0 %v233
    %v273 = vpop.f32.mrf.mxu0
    %v274 = vadd.f32 %v200, %v273
    %275 = vmatmul.f32.gmra.mxu0 %v236
    %v276 = vpop.f32.mrf.mxu0
    %v277 = vadd.f32 %v205, %v276
    %278 = vmatmul.f32.gmra.mxu0 %v239
    %v279 = vpop.f32.mrf.mxu0
    %v280 = vadd.f32 %v210, %v279
    %281 = vmatmul.f32.gmra.mxu0 %v242
    %v282 = vpop.f32.mrf.mxu0
    %v283 = vadd.f32 %v215, %v282
    %284 = vmatmul.f32.gmra.mxu0 %v245
    %v285 = vpop.f32.mrf.mxu0
    %v286 = vadd.f32 %v220, %v285
    %287 = vdwg.mxu0
    %v288 = vmax.f32 %v265, 0.0
    %v289 = vmax.f32 %v268, 0.0
    %v290 = vmax.f32 %v271, 0.0
    %v291 = vmax.f32 %v274, 0.0
    %v292 = vmax.f32 %v277, 0.0
    %v293 = vmax.f32 %v280, 0.0
    %v294 = vmax.f32 %v283, 0.0
    %v295 = vmax.f32 %v286, 0.0
    %v296 = vld [vmem:[%s5] sm:$0x1]
    %v297 = vld [vmem:[#allocation2] sm:$0x1]
    %299 = vset.pattern.permute.xlu0 0
    %300 = vperm.xlu0 %299, %v297
    %v301 = vpop.permute.xlu0 %300
    %v303 = vperm.slane %v301, 0
    %v305 = vsel %vm222, %v296, 0
    %307 = vmatpush.msra.mxu0 0.0
    %308 = vmatpush.msra.mxu0 0.0
    %309 = vmatpush.msra.mxu0 0.0
    %310 = vmatpush.msra.mxu0 0.0
    %311 = vmatpush.msra.mxu0 0.0
    %312 = vmatpush.msra.mxu0 0.0
    %313 = vmatpush.msra.mxu0 0.0
    %314 = vmatpush.msra.mxu0 0.0
    %315 = vmatpush.msra.mxu0 %v295
    %316 = vmatpush.msra.mxu0 %v294
    %317 = vmatpush.msra.mxu0 %v293
    %318 = vmatpush.msra.mxu0 %v292
    %319 = vmatpush.msra.mxu0 %v291
    %320 = vmatpush.msra.mxu0 %v290
    %321 = vmatpush.msra.mxu0 %v289
    %322 = vmatpush.msra.mxu0 %v288
    %323 = vmatmul.f32.gmra.mxu0 %v305
    %v324 = vpop.f32.mrf.mxu0
    %v325 = vadd.f32 %v303, %v324
    %326 = vdwg.mxu0
    %vm327 = vcmask 57344
    %328 = vst.msk [vmem:[#allocation3] sm:$0x1] %vm327, %v325
    // Predicated region
    $region30: #{tpu_custom_call.1} parent=1 // pred_check
      _
    $region31: #{tpu_custom_call.1} parent=1 // pred_check_branch
      %330 = sbr.rel (0) target = $region33
    $region32: #{tpu_custom_call.1} parent=1 // pred_region
      %332 = vsyncadd [#allocation4], 0
      %s334 = sshll.u32 [#allocation3], 4
      %s335 = int_to_ptr.vmem [resolvable:$true] %s334
      %s336 = sshll.u32 %s7, 4
      %s337 = int_to_ptr.hbm [resolvable:$true] %s336
      %339 = dma.vmem_to_hbm [thread:$0]  %s335, 16, %s337, [#allocation4]
    $region33: #{tpu_custom_call.1} parent=1 // pred_fallthru
      _
    // Predicated region
    $region34: #{tpu_custom_call.1} parent=1 // pred_check
      _
    $region35: #{tpu_custom_call.1} parent=1 // pred_check_branch
      %341 = sbr.rel (0) target = $region37
    $region36: #{tpu_custom_call.1} parent=1 // pred_region
      %343 = dma.done [#allocation4], 16
    $region37: #{tpu_custom_call.1} parent=1 // pred_fallthru
      _
    %344 = vsyncpa [#allocation4], 1

</llo_original>
